<compile_context>
chip_gen: v5e
topology: v5e:2x2
jax: 0.10.0
libtpu: 0.0.40
codegen_flags: <defaults>
</compile_context>

<pallas_src>
import functools
from typing import NamedTuple

import jax
import jax.numpy as jnp
from jax.experimental import pallas as pl
from jax.experimental.pallas import tpu as pltpu


def _round_up(v: int, m: int) -> int:
    return (v + m - 1) // m * m


def _vmem_capacity_bytes() -> int:
    """Physical VMEM per TensorCore (128 MiB v5e/v6e, 64 MiB v7x)."""
    try:
        return int(pltpu.get_tpu_info().vmem_capacity_bytes)
    except Exception:
        return 64 * 1024 * 1024  # conservative fallback (v7x per-TC)


class MLPPlan(NamedTuple):
    tm: int          # batch tile
    tn: int          # output-feature tile
    tk: int          # hidden-feature (reduction) tile
    d_in_p: int      # padded input dim
    h_p: int         # padded hidden dim (multiple of tk)
    d_out_p: int     # padded output dim (multiple of tn)
    out_dim: int     # true output dim (for the final slice)
    vmem_limit: int  # vmem_limit_bytes for CompilerParams


def make_plan(batch, d_in, hidden, d_out, x_dtype, w_dtype, block_m=256):
    """Choose lane-dense, VMEM-fitting tiles for the fused MLP kernel."""
    xb = jnp.dtype(x_dtype).itemsize
    wb = jnp.dtype(w_dtype).itemsize
    ob = xb  # output matches the input dtype
    align_m = 16 if xb == 2 else 8  # bf16 packs 2 rows/sublane

    d_in_p = _round_up(d_in, 128)
    tm = min(_round_up(block_m, align_m), _round_up(batch, align_m))
    tn = _round_up(d_out, 128)
    tk = _round_up(hidden, 128)

    cap = _vmem_capacity_bytes()
    budget = int(0.80 * cap)  # headroom for Mosaic-internal scratch

    def footprint(tm_, tn_, tk_, weights_x2):
        h_p_ = _round_up(hidden, tk_)
        d_out_p_ = _round_up(d_out, tn_)
        nk_ = h_p_ // tk_
        nn_ = d_out_p_ // tn_
        w1_buf = (2 if weights_x2 else 1) if nk_ == 1 else 2
        w2_buf = (2 if weights_x2 else 1) if (nk_ == 1 and nn_ == 1) else 2
        b2_buf = (2 if weights_x2 else 1) if nn_ == 1 else 2
        return (2 * xb * tm_ * d_in_p                  # x tile (double-buffered)
                + w1_buf * wb * (d_in_p * tk_ + tk_)   # w1 + b1
                + w2_buf * wb * tk_ * tn_              # w2
                + b2_buf * wb * tn_                    # b2
                + 2 * ob * tm_ * tn_                   # out tile (double-buffered)
                + wb * tm_ * tk_                       # h scratch (fc2 operand dtype)
                + 4 * tm_ * tn_)                       # f32 accumulator

    # Shrink hidden / output / batch tiles (in that order) until the tile set
    # fits the per-generation budget.  Zero padding is exact for this network,
    # so padding H/D_out up to tile multiples is safe.
    while footprint(tm, tn, tk, False) > budget and tk > 512:
        tk = _round_up(tk // 2, 128)
    while footprint(tm, tn, tk, False) > budget and tn > 512:
        tn = _round_up(tn // 2, 128)
    while footprint(tm, tn, tk, False) > budget and tm > align_m:
        tm = max(align_m, _round_up(tm // 2, align_m))
    # TODO(synk): if the x tile + a single w1 column block still overflow VMEM
    #             (huge D_in), a D_in reduction grid axis would also be needed.

    h_p = _round_up(hidden, tk)
    d_out_p = _round_up(d_out, tn)

    # v7x megacore: give the "parallel" axes at least 2 steps when batch allows,
    # so both TensorCores get work and the x/out DMAs can pipeline.
    if (_round_up(batch, tm) // tm) * (d_out_p // tn) == 1 and batch > align_m:
        tm = _round_up(-(-batch // 2), align_m)

    # vmem_limit: conservative estimate (weights counted double-buffered) plus
    # headroom, floored at 16 MiB, clamped to ~85% of physical VMEM.
    fp = footprint(tm, tn, tk, True)
    vmem_limit = min(max(int(1.25 * fp) + (2 << 20), 16 * 1024 * 1024),
                     int(0.85 * cap))

    return MLPPlan(tm=tm, tn=tn, tk=tk, d_in_p=d_in_p, h_p=h_p,
                   d_out_p=d_out_p, out_dim=d_out, vmem_limit=vmem_limit)


def pad_params(w1, b1, w2, b2, plan: MLPPlan):
    """Pad parameters once at init (keeps the per-call hot path weight-pad free).

    Zero padding is exact for Linear -> ReLU -> Linear: extra input cols hit
    zero weight rows; extra hidden cols get bias 0 -> relu(0)=0 -> multiply
    zero rows of w2; extra output cols are sliced off after the kernel.
    """
    d_in, h = w1.shape
    d_out = w2.shape[1]
    b1 = b1.reshape(1, -1)
    b2 = b2.reshape(1, -1)
    w1 = jnp.pad(w1, ((0, plan.d_in_p - d_in), (0, plan.h_p - h)))
    b1 = jnp.pad(b1, ((0, 0), (0, plan.h_p - h)))
    w2 = jnp.pad(w2, ((0, plan.h_p - h), (0, plan.d_out_p - d_out)))
    b2 = jnp.pad(b2, ((0, 0), (0, plan.d_out_p - d_out)))
    return w1, b1, w2, b2


def mlp_kernel(x_ref, w1_ref, b1_ref, w2_ref, b2_ref, o_ref, h_ref, acc_ref):
    k = pl.program_id(2)

    # fc1 partial: (TM, D_in) @ (D_in, TK) on the MXU, f32 accumulation.
    # Cast x to the fc1 weight dtype so bf16 weights use the bf16 MXU path.
    h = jnp.dot(x_ref[...].astype(w1_ref.dtype), w1_ref[...],
                preferred_element_type=jnp.float32)
    # bias + ReLU; stage through VMEM in the fc2 operand dtype.
    # Dropout (p=0.5) is identity in eval/inference mode.
    h_ref[...] = jnp.maximum(h + b1_ref[...], 0.0).astype(h_ref.dtype)

    @pl.when(k == 0)
    def _():
        acc_ref[...] = jnp.zeros_like(acc_ref)

    # fc2 partial, accumulated over the hidden (K) tiles: (TM, TK) @ (TK, TN).
    acc_ref[...] += jnp.dot(h_ref[...], w2_ref[...],
                            preferred_element_type=jnp.float32)

    @pl.when(k == pl.num_programs(2) - 1)
    def _():
        o_ref[...] = (acc_ref[...] + b2_ref[...]).astype(o_ref.dtype)


def _block_spec(shape, index_map, single_buffered):
    """BlockSpec; grid-invariant operands request a single (resident) buffer."""
    if single_buffered:
        try:
            return pl.BlockSpec(shape, index_map, pipeline_mode=pl.Buffered(1))
        except TypeError:  # pipeline_mode unsupported -> plain (double-buffered)
            pass
    return pl.BlockSpec(shape, index_map)


@functools.partial(jax.jit, static_argnames=("plan",))
def mlp_forward(x, w1, b1, w2, b2, plan: MLPPlan):
    """x: (B, D_in). w1/b1/w2/b2 must already be padded via pad_params(plan)."""
    batch, d_in = x.shape
    tm, tn, tk = plan.tm, plan.tn, plan.tk
    b_p = _round_up(batch, tm)

    if (b_p, plan.d_in_p) != (batch, d_in):
        x = jnp.pad(x, ((0, b_p - batch), (0, plan.d_in_p - d_in)))

    grid = (b_p // tm, plan.d_out_p // tn, plan.h_p // tk)
    nn, nk = grid[1], grid[2]

    out_p = pl.pallas_call(
        mlp_kernel,
        out_shape=jax.ShapeDtypeStruct((b_p, plan.d_out_p), x.dtype),
        grid_spec=pltpu.PrefetchScalarGridSpec(
            num_scalar_prefetch=0,
            grid=grid,
            in_specs=[
                # x tile: pipelined over the batch axis.
                pl.BlockSpec((tm, plan.d_in_p), lambda i, j, k: (i, 0)),
                # w1 / b1: vary only with k; resident when nk == 1.
                _block_spec((plan.d_in_p, tk), lambda i, j, k: (0, k), nk == 1),
                _block_spec((1, tk), lambda i, j, k: (0, k), nk == 1),
                # w2: varies with (k, j); resident when nk == nn == 1.
                _block_spec((tk, tn), lambda i, j, k: (k, j),
                            nk == 1 and nn == 1),
                # b2: varies with j; resident when nn == 1.
                _block_spec((1, tn), lambda i, j, k: (0, j), nn == 1),
            ],
            out_specs=pl.BlockSpec((tm, tn), lambda i, j, k: (i, j)),
            scratch_shapes=[
                pltpu.VMEM((tm, tk), w2.dtype),     # fc1 activations (fc2 dtype)
                pltpu.VMEM((tm, tn), jnp.float32),  # fc2 accumulator
            ],
        ),
        compiler_params=pltpu.CompilerParams(
            dimension_semantics=("parallel", "parallel", "arbitrary"),
            vmem_limit_bytes=plan.vmem_limit,
        ),
    )(x, w1, b1, w2, b2)

    return out_p[:batch, :plan.out_dim]


def init_linear_params(key, in_features, out_features, dtype=jnp.float32):
    """PyTorch nn.Linear default init: U(-1/sqrt(fan_in), 1/sqrt(fan_in))."""
    k_w, k_b = jax.random.split(key)
    bound = 1.0 / jnp.sqrt(jnp.float32(in_features))
    # Stored transposed relative to PyTorch (in, out) so the kernel does x @ W.
    w = jax.random.uniform(k_w, (in_features, out_features), dtype,
                           minval=-bound, maxval=bound)
    b = jax.random.uniform(k_b, (1, out_features), dtype,
                           minval=-bound, maxval=bound)
    return w, b


if __name__ == "__main__":
    # Small demo shapes consistent with the module (launch-overhead-bound here;
    # the tiling / single-buffered weights pay off at realistic B / D_in / H).
    input_dim, hidden_dim, output_dim = 32, 64, 16
    batch = 8

    key = jax.random.PRNGKey(0)
    k_x, k_fc1, k_fc2 = jax.random.split(key, 3)

    x = jax.random.normal(k_x, (batch, input_dim), jnp.float32)
    w1, b1 = init_linear_params(k_fc1, input_dim, hidden_dim)
    w2, b2 = init_linear_params(k_fc2, hidden_dim, output_dim)

    # Plan + one-time parameter padding (out of the per-call hot path).
    plan = make_plan(batch, input_dim, hidden_dim, output_dim,
                     x.dtype, w1.dtype)
    w1_p, b1_p, w2_p, b2_p = pad_params(w1, b1, w2, b2, plan)

    out = mlp_forward(x, w1_p, b1_p, w2_p, b2_p, plan=plan)
    out = jax.block_until_ready(out)

    # Reference check in plain JAX (Linear -> ReLU -> [dropout=identity] -> Linear).
    ref = jnp.maximum(x @ w1 + b1, 0.0) @ w2 + b2
    assert out.shape == (batch, output_dim)
    assert jnp.allclose(out, ref, atol=1e-5, rtol=1e-5), \
        float(jnp.max(jnp.abs(out - ref)))

    print("KERNEL_OK")
</pallas_src>

<mosaic_0001>
module attributes {stable_mosaic.version = 11 : i64} {
  func.func @mlp_kernel(%arg0: i32, %arg1: i32, %arg2: i32, %arg3: memref<8x128xf32, #tpu.memory_space<vmem>>, %arg4: memref<128x128xf32, #tpu.memory_space<vmem>>, %arg5: memref<1x128xf32, #tpu.memory_space<vmem>>, %arg6: memref<128x128xf32, #tpu.memory_space<vmem>>, %arg7: memref<1x128xf32, #tpu.memory_space<vmem>>, %arg8: memref<8x128xf32, #tpu.memory_space<vmem>>, %arg9: memref<8x128xf32, #tpu.memory_space<vmem>>, %arg10: memref<8x128xf32, #tpu.memory_space<vmem>>) attributes {dimension_semantics = [#tpu.dimension_semantics<parallel>, #tpu.dimension_semantics<parallel>, #tpu.dimension_semantics<arbitrary>], iteration_bounds = array<i64: 1, 1, 1>, scalar_prefetch = 0 : i64, scratch_operands = 2 : i64, tpu.core_type = #tpu.core_type<tc>, window_params = [{transform_indices = @transform_0, window_bounds = array<i64: 8, 128>}, {pipeline_mode = #tpu.pipeline_mode<synchronous>, transform_indices = @transform_1, window_bounds = array<i64: 128, 128>}, {pipeline_mode = #tpu.pipeline_mode<synchronous>, transform_indices = @transform_2, window_bounds = array<i64: 1, 128>}, {pipeline_mode = #tpu.pipeline_mode<synchronous>, transform_indices = @transform_3, window_bounds = array<i64: 128, 128>}, {pipeline_mode = #tpu.pipeline_mode<synchronous>, transform_indices = @transform_4, window_bounds = array<i64: 1, 128>}, {transform_indices = @transform_5, window_bounds = array<i64: 8, 128>}]} {
    %c0 = arith.constant 0 : index
    %c0_0 = arith.constant 0 : index
    %0 = vector.load %arg3[%c0, %c0_0] : memref<8x128xf32, #tpu.memory_space<vmem>>, vector<8x128xf32>
    %c0_1 = arith.constant 0 : index
    %c0_2 = arith.constant 0 : index
    %1 = vector.load %arg4[%c0_1, %c0_2] : memref<128x128xf32, #tpu.memory_space<vmem>>, vector<128x128xf32>
    %cst = arith.constant dense<0.000000e+00> : vector<8x128xf32>
    %2 = tpu.matmul %0, %1, %cst {dimension_numbers = #tpu.dot_dimension_numbers<[1], [0], [0], [1], [0, 0, 1, 1], [], []>} : vector<8x128xf32>, vector<128x128xf32>, vector<8x128xf32> -> vector<8x128xf32>
    %c0_3 = arith.constant 0 : index
    %c0_4 = arith.constant 0 : index
    %3 = vector.load %arg5[%c0_3, %c0_4] : memref<1x128xf32, #tpu.memory_space<vmem>>, vector<1x128xf32>
    %4 = vector.broadcast %3 : vector<1x128xf32> to vector<8x128xf32>
    %5 = arith.addf %2, %4 : vector<8x128xf32>
    %cst_5 = arith.constant 0.000000e+00 : f32
    %6 = vector.broadcast %cst_5 : f32 to vector<8x128xf32>
    %7 = arith.maximumf %5, %6 : vector<8x128xf32>
    %c0_6 = arith.constant 0 : index
    %c0_7 = arith.constant 0 : index
    %8 = vector.load %arg9[%c0_6, %c0_7] : memref<8x128xf32, #tpu.memory_space<vmem>>, vector<8x128xf32>
    tpu.vector_store %arg9[%c0_6, %c0_7], %7 {strides = array<i32>} : memref<8x128xf32, #tpu.memory_space<vmem>>, vector<8x128xf32>,
    %c0_i32 = arith.constant 0 : i32
    %9 = arith.cmpi eq, %arg2, %c0_i32 : i32
    %10 = arith.extui %9 : i1 to i32
    %c0_i32_8 = arith.constant 0 : i32
    %11 = arith.cmpi ne, %10, %c0_i32_8 : i32
    scf.if %11 {
      %cst_20 = arith.constant 0.000000e+00 : f32
      %21 = vector.broadcast %cst_20 : f32 to vector<8x128xf32>
      %c0_21 = arith.constant 0 : index
      %c0_22 = arith.constant 0 : index
      %22 = vector.load %arg10[%c0_21, %c0_22] : memref<8x128xf32, #tpu.memory_space<vmem>>, vector<8x128xf32>
      tpu.vector_store %arg10[%c0_21, %c0_22], %21 {strides = array<i32>} : memref<8x128xf32, #tpu.memory_space<vmem>>, vector<8x128xf32>,
    } else {
    }
    %c0_9 = arith.constant 0 : index
    %c0_10 = arith.constant 0 : index
    %12 = vector.load %arg10[%c0_9, %c0_10] : memref<8x128xf32, #tpu.memory_space<vmem>>, vector<8x128xf32>
    %c0_11 = arith.constant 0 : index
    %c0_12 = arith.constant 0 : index
    %13 = vector.load %arg9[%c0_11, %c0_12] : memref<8x128xf32, #tpu.memory_space<vmem>>, vector<8x128xf32>
    %c0_13 = arith.constant 0 : index
    %c0_14 = arith.constant 0 : index
    %14 = vector.load %arg6[%c0_13, %c0_14] : memref<128x128xf32, #tpu.memory_space<vmem>>, vector<128x128xf32>
    %cst_15 = arith.constant dense<0.000000e+00> : vector<8x128xf32>
    %15 = tpu.matmul %13, %14, %cst_15 {dimension_numbers = #tpu.dot_dimension_numbers<[1], [0], [0], [1], [0, 0, 1, 1], [], []>} : vector<8x128xf32>, vector<128x128xf32>, vector<8x128xf32> -> vector<8x128xf32>
    %16 = arith.addf %12, %15 : vector<8x128xf32>
    %c0_16 = arith.constant 0 : index
    %c0_17 = arith.constant 0 : index
    %17 = vector.load %arg10[%c0_16, %c0_17] : memref<8x128xf32, #tpu.memory_space<vmem>>, vector<8x128xf32>
    tpu.vector_store %arg10[%c0_16, %c0_17], %16 {strides = array<i32>} : memref<8x128xf32, #tpu.memory_space<vmem>>, vector<8x128xf32>,
    %c0_i32_18 = arith.constant 0 : i32
    %18 = arith.cmpi eq, %arg2, %c0_i32_18 : i32
    %19 = arith.extui %18 : i1 to i32
    %c0_i32_19 = arith.constant 0 : i32
    %20 = arith.cmpi ne, %19, %c0_i32_19 : i32
    scf.if %20 {
      %c0_20 = arith.constant 0 : index
      %c0_21 = arith.constant 0 : index
      %21 = vector.load %arg10[%c0_20, %c0_21] : memref<8x128xf32, #tpu.memory_space<vmem>>, vector<8x128xf32>
      %c0_22 = arith.constant 0 : index
      %c0_23 = arith.constant 0 : index
      %22 = vector.load %arg7[%c0_22, %c0_23] : memref<1x128xf32, #tpu.memory_space<vmem>>, vector<1x128xf32>
      %23 = vector.broadcast %22 : vector<1x128xf32> to vector<8x128xf32>
      %24 = arith.addf %21, %23 : vector<8x128xf32>
      %c0_24 = arith.constant 0 : index
      %c0_25 = arith.constant 0 : index
      %25 = vector.load %arg8[%c0_24, %c0_25] : memref<8x128xf32, #tpu.memory_space<vmem>>, vector<8x128xf32>
      tpu.vector_store %arg8[%c0_24, %c0_25], %24 {strides = array<i32>} : memref<8x128xf32, #tpu.memory_space<vmem>>, vector<8x128xf32>,
    } else {
    }
    return
  }
  func.func @transform_0(%arg0: i32, %arg1: i32, %arg2: i32) -> (i32, i32) {
    %c0_i32 = arith.constant 0 : i32
    %c0_i32_0 = arith.constant 0 : i32
    return %arg0, %c0_i32 : i32, i32
  }
  func.func @transform_1(%arg0: i32, %arg1: i32, %arg2: i32) -> (i32, i32) {
    %c0_i32 = arith.constant 0 : i32
    %c0_i32_0 = arith.constant 0 : i32
    return %c0_i32, %arg2 : i32, i32
  }
  func.func @transform_2(%arg0: i32, %arg1: i32, %arg2: i32) -> (i32, i32) {
    %c0_i32 = arith.constant 0 : i32
    %c0_i32_0 = arith.constant 0 : i32
    return %c0_i32, %arg2 : i32, i32
  }
  func.func @transform_3(%arg0: i32, %arg1: i32, %arg2: i32) -> (i32, i32) {
    %c0_i32 = arith.constant 0 : i32
    return %arg2, %arg1 : i32, i32
  }
  func.func @transform_4(%arg0: i32, %arg1: i32, %arg2: i32) -> (i32, i32) {
    %c0_i32 = arith.constant 0 : i32
    %c0_i32_0 = arith.constant 0 : i32
    return %c0_i32, %arg1 : i32, i32
  }
  func.func @transform_5(%arg0: i32, %arg1: i32, %arg2: i32) -> (i32, i32) {
    %c0_i32 = arith.constant 0 : i32
    return %arg0, %arg1 : i32, i32
  }
}

</mosaic_0001>

<llo_original>
// kernel: mlp_forward.1
$region0: #{mlp_forward.1}
  #allocation0 [shape = 'u32[]', space=smem, size = 0x4, offset = 0x4, fixed_abs, tag = 'smem constant byte address 0x4 - core index']
  #allocation1 [shape = 'u32[72,128]{1,0:T(1,128)}', space=vmem, size = 0x9000, scoped, tag = 'internal scratch']
  #allocation2 [shape = 'f32[8,128]{1,0:T(8,128)}', space=vmem, size = 0x1000, scoped, tag = 'scratch operand']
  #allocation3 [shape = 'f32[8,128]{1,0:T(8,128)}', space=vmem, size = 0x1000, scoped, tag = 'scratch operand']
  %s0 = inlined_call_operand.vmem [shape: f32[8,128], index: 0, kind: input, shape index: {}]
  %s1 = inlined_call_operand.hbm [shape: f32[128,128], index: 1, kind: input, shape index: {}]
  %s2 = inlined_call_operand.vmem [shape: f32[1,128], index: 2, kind: input, shape index: {}]
  %s3 = inlined_call_operand.hbm [shape: f32[128,128], index: 3, kind: input, shape index: {}]
  %s4 = inlined_call_operand.vmem [shape: f32[1,128], index: 4, kind: input, shape index: {}]
  %s5 = inlined_call_operand.hbm [shape: f32[8,128], index: 5, kind: output, shape index: {}]
  %s6 = sld [smem:[#allocation0]]
  $region46: #{mlp_forward.1} parent=0
    _
  %s8 = ssub.s32 1, %s6
  %s9 = scalar_select 0, %s8, %s6
  $region1: #{mlp_forward.1} parent=0
    #allocation4 [shape = 'u8[65536]{0}', space=vmem, size = 0x10000, scoped, tag = 'input window, operand 1, single buffered']
    #allocation5 [shape = 's32[1]{0}', space=sflag, size = 0x4, scoped, tag = 'scoped memory for mlp_forward.1']
    #allocation6 [shape = 's32[1]{0}', space=sflag, size = 0x4, scoped, tag = 'scoped memory for mlp_forward.1']
    #allocation7 [shape = 'u8[65536]{0}', space=vmem, size = 0x10000, scoped, tag = 'input window, operand 3, single buffered']
    #allocation8 [shape = 's32[1]{0}', space=sflag, size = 0x4, scoped, tag = 'scoped memory for mlp_forward.1']
    #allocation9 [shape = 'u8[4096]{0}', space=vmem, size = 0x1000, scoped, tag = 'output window, operand 0, single buffered']
    %10 = vsyncpa [#allocation5], 0
    %11 = vsyncpa [#allocation8], 0
    %12 = vsyncpa [#allocation6], 0
    // Predicated region
    $region2: #{mlp_forward.1} parent=1 // pred_check
      _
    $region3: #{mlp_forward.1} parent=1 // pred_check_branch
      %14 = sbr.rel (0) target = $region5
    $region4: #{mlp_forward.1} parent=1 // pred_region
      _
    $region5: #{mlp_forward.1} parent=1 // pred_fallthru
      _
    // Predicated region
    $region6: #{mlp_forward.1} parent=1 // pred_check
      _
    $region7: #{mlp_forward.1} parent=1 // pred_check_branch
      %16 = sbr.rel (0) target = $region9
    $region8: #{mlp_forward.1} parent=1 // pred_region
      %18 = vsyncadd [#allocation5], 0
      %s19 = sshll.u32 %s1, 4
      %s20 = int_to_ptr.hbm [resolvable:$true] %s19
      %s21 = sshll.u32 [#allocation4], 4
      %s22 = int_to_ptr.vmem [resolvable:$true] %s21
      %27 = dma.hbm_to_vmem [thread:$0]  %s20, 2048, %s22, [#allocation5], 128, 128, 8
    $region9: #{mlp_forward.1} parent=1 // pred_fallthru
      _
    // Predicated region
    $region10: #{mlp_forward.1} parent=1 // pred_check
      _
    $region11: #{mlp_forward.1} parent=1 // pred_check_branch
      %29 = sbr.rel (0) target = $region13
    $region12: #{mlp_forward.1} parent=1 // pred_region
      _
    $region13: #{mlp_forward.1} parent=1 // pred_fallthru
      _
    // Predicated region
    $region14: #{mlp_forward.1} parent=1 // pred_check
      _
    $region15: #{mlp_forward.1} parent=1 // pred_check_branch
      %31 = sbr.rel (0) target = $region17
    $region16: #{mlp_forward.1} parent=1 // pred_region
      %33 = vsyncadd [#allocation8], 0
      %s34 = sshll.u32 %s3, 4
      %s35 = int_to_ptr.hbm [resolvable:$true] %s34
      %s36 = sshll.u32 [#allocation7], 4
      %s37 = int_to_ptr.vmem [resolvable:$true] %s36
      %42 = dma.hbm_to_vmem [thread:$0]  %s35, 2048, %s37, [#allocation8], 128, 128, 8
    $region17: #{mlp_forward.1} parent=1 // pred_fallthru
      _
    // Predicated region
    $region18: #{mlp_forward.1} parent=1 // pred_check
      _
    $region19: #{mlp_forward.1} parent=1 // pred_check_branch
      %44 = sbr.rel (0) target = $region21
    $region20: #{mlp_forward.1} parent=1 // pred_region
      _
    $region21: #{mlp_forward.1} parent=1 // pred_fallthru
      _
    // Predicated region
    $region22: #{mlp_forward.1} parent=1 // pred_check
      _
    $region23: #{mlp_forward.1} parent=1 // pred_check_branch
      %46 = sbr.rel (0) target = $region25
    $region24: #{mlp_forward.1} parent=1 // pred_region
      %48 = dma.done [#allocation5], 2048
    $region25: #{mlp_forward.1} parent=1 // pred_fallthru
      _
    // Predicated region
    $region26: #{mlp_forward.1} parent=1 // pred_check
      _
    $region27: #{mlp_forward.1} parent=1 // pred_check_branch
      %50 = sbr.rel (0) target = $region29
    $region28: #{mlp_forward.1} parent=1 // pred_region
      %52 = dma.done [#allocation8], 2048
    $region29: #{mlp_forward.1} parent=1 // pred_fallthru
      _
    %v53 = vld [vmem:[%s0] sm:$0xff]
    %v54 = vld [vmem:[#allocation4] sm:$0xff]
    %v55 = vld [vmem:[#allocation4 + $0x8] sm:$0xff]
    %v56 = vld [vmem:[#allocation4 + $0x10] sm:$0xff]
    %v57 = vld [vmem:[#allocation4 + $0x18] sm:$0xff]
    %v58 = vld [vmem:[#allocation4 + $0x20] sm:$0xff]
    %v59 = vld [vmem:[#allocation4 + $0x28] sm:$0xff]
    %v60 = vld [vmem:[#allocation4 + $0x30] sm:$0xff]
    %v61 = vld [vmem:[#allocation4 + $0x38] sm:$0xff]
    %v62 = vld [vmem:[#allocation4 + $0x40] sm:$0xff]
    %v63 = vld [vmem:[#allocation4 + $0x48] sm:$0xff]
    %v64 = vld [vmem:[#allocation4 + $0x50] sm:$0xff]
    %v65 = vld [vmem:[#allocation4 + $0x58] sm:$0xff]
    %v66 = vld [vmem:[#allocation4 + $0x60] sm:$0xff]
    %v67 = vld [vmem:[#allocation4 + $0x68] sm:$0xff]
    %v68 = vld [vmem:[#allocation4 + $0x70] sm:$0xff]
    %v69 = vld [vmem:[#allocation4 + $0x78] sm:$0xff]
    %v70 = vld [vmem:[%s2] sm:$0x1]
    %v72 = vperm.slane %v70, 0
    %74 = vmatpush.msra.mxu0 %v69
    %75 = vmatpush.msra.mxu0 %v68
    %76 = vmatpush.msra.mxu0 %v67
    %77 = vmatpush.msra.mxu0 %v66
    %78 = vmatpush.msra.mxu0 %v65
    %79 = vmatpush.msra.mxu0 %v64
    %80 = vmatpush.msra.mxu0 %v63
    %81 = vmatpush.msra.mxu0 %v62
    %82 = vmatpush.msra.mxu0 %v61
    %83 = vmatpush.msra.mxu0 %v60
    %84 = vmatpush.msra.mxu0 %v59
    %85 = vmatpush.msra.mxu0 %v58
    %86 = vmatpush.msra.mxu0 %v57
    %87 = vmatpush.msra.mxu0 %v56
    %88 = vmatpush.msra.mxu0 %v55
    %89 = vmatpush.msra.mxu0 %v54
    %90 = vmatmul.f32.gmra.mxu0 %v53
    %v91 = vpop.f32.mrf.mxu0
    %v92 = vadd.f32 %v72, %v91
    %93 = vdwg.mxu0
    %v94 = vmax.f32 %v92, 0.0
    %95 = vst [vmem:[#allocation2] sm:$0xff] %v94
    %p96 = scmp.eq.s32.totalorder 0, 0
    // Predicated region
    $region30: #{mlp_forward.1} parent=1 // pred_check
      %p97 = pneg %p96
    $region31: #{mlp_forward.1} parent=1 // pred_check_branch
      %99 = sbr.rel (%p97) target = $region33
    $region32: #{mlp_forward.1} parent=1 // pred_region
      %100 = vst [vmem:[#allocation3] sm:$0xff] 0.0
    $region33: #{mlp_forward.1} parent=1 // pred_fallthru
      _
    %v101 = vld [vmem:[#allocation3] sm:$0xff]
    %v102 = vld [vmem:[#allocation2] sm:$0xff]
    %v103 = vld [vmem:[#allocation7] sm:$0xff]
    %v104 = vld [vmem:[#allocation7 + $0x8] sm:$0xff]
    %v105 = vld [vmem:[#allocation7 + $0x10] sm:$0xff]
    %v106 = vld [vmem:[#allocation7 + $0x18] sm:$0xff]
    %v107 = vld [vmem:[#allocation7 + $0x20] sm:$0xff]
    %v108 = vld [vmem:[#allocation7 + $0x28] sm:$0xff]
    %v109 = vld [vmem:[#allocation7 + $0x30] sm:$0xff]
    %v110 = vld [vmem:[#allocation7 + $0x38] sm:$0xff]
    %v111 = vld [vmem:[#allocation7 + $0x40] sm:$0xff]
    %v112 = vld [vmem:[#allocation7 + $0x48] sm:$0xff]
    %v113 = vld [vmem:[#allocation7 + $0x50] sm:$0xff]
    %v114 = vld [vmem:[#allocation7 + $0x58] sm:$0xff]
    %v115 = vld [vmem:[#allocation7 + $0x60] sm:$0xff]
    %v116 = vld [vmem:[#allocation7 + $0x68] sm:$0xff]
    %v117 = vld [vmem:[#allocation7 + $0x70] sm:$0xff]
    %v118 = vld [vmem:[#allocation7 + $0x78] sm:$0xff]
    %119 = vmatpush.msra.mxu0 %v118
    %120 = vmatpush.msra.mxu0 %v117
    %121 = vmatpush.msra.mxu0 %v116
    %122 = vmatpush.msra.mxu0 %v115
    %123 = vmatpush.msra.mxu0 %v114
    %124 = vmatpush.msra.mxu0 %v113
    %125 = vmatpush.msra.mxu0 %v112
    %126 = vmatpush.msra.mxu0 %v111
    %127 = vmatpush.msra.mxu0 %v110
    %128 = vmatpush.msra.mxu0 %v109
    %129 = vmatpush.msra.mxu0 %v108
    %130 = vmatpush.msra.mxu0 %v107
    %131 = vmatpush.msra.mxu0 %v106
    %132 = vmatpush.msra.mxu0 %v105
    %133 = vmatpush.msra.mxu0 %v104
    %134 = vmatpush.msra.mxu0 %v103
    %135 = vmatmul.f32.gmra.mxu0 %v102
    %v136 = vpop.f32.mrf.mxu0
    %v137 = vadd.f32 0.0, %v136
    %138 = vdwg.mxu0
    %v139 = vadd.f32 %v101, %v137
    %140 = vst [vmem:[#allocation3] sm:$0xff] %v139
    // Predicated region
    $region34: #{mlp_forward.1} parent=1 // pred_check
      %p141 = pneg %p96
    $region35: #{mlp_forward.1} parent=1 // pred_check_branch
      %143 = sbr.rel (%p141) target = $region37
    $region36: #{mlp_forward.1} parent=1 // pred_region
      %v144 = vld [vmem:[#allocation3] sm:$0xff]
      %v145 = vld [vmem:[%s4] sm:$0x1]
      %v147 = vperm.slane %v145, 0
      %v149 = vadd.f32 %v144, %v147
      %150 = vst [vmem:[#allocation9] sm:$0xff] %v149
    $region37: #{mlp_forward.1} parent=1 // pred_fallthru
      _
    // Predicated region
    $region38: #{mlp_forward.1} parent=1 // pred_check
      _
    $region39: #{mlp_forward.1} parent=1 // pred_check_branch
      %152 = sbr.rel (0) target = $region41
    $region40: #{mlp_forward.1} parent=1 // pred_region
      %154 = vsyncadd [#allocation6], 0
      %s156 = sshll.u32 [#allocation9], 4
      %s157 = int_to_ptr.vmem [resolvable:$true] %s156
      %s158 = sshll.u32 %s5, 4
      %s159 = int_to_ptr.hbm [resolvable:$true] %s158
      %161 = dma.vmem_to_hbm [thread:$0]  %s157, 128, %s159, [#allocation6]
    $region41: #{mlp_forward.1} parent=1 // pred_fallthru
      _
    // Predicated region
    $region42: #{mlp_forward.1} parent=1 // pred_check
      _
    $region43: #{mlp_forward.1} parent=1 // pred_check_branch
      %163 = sbr.rel (0) target = $region45
    $region44: #{mlp_forward.1} parent=1 // pred_region
      %165 = dma.done [#allocation6], 128
    $region45: #{mlp_forward.1} parent=1 // pred_fallthru
      _
    %166 = vsyncpa [#allocation5], 1
    %167 = vsyncpa [#allocation8], 1
    %168 = vsyncpa [#allocation6], 1

</llo_original>
